<compile_context>
chip_gen: v7x
topology: tpu7x:2x2x1
jax: 0.10.0
libtpu: 0.0.40
codegen_flags: <defaults>
</compile_context>

<pallas_src>
import functools

import jax
import jax.numpy as jnp
from jax.experimental import pallas as pl
from jax.experimental.pallas import tpu as pltpu


_INV_SQRT2 = 0.7071067811865476


def _gelu_exact(x):
    # torch nn.GELU() default: 0.5 * x * (1 + erf(x / sqrt(2)))   (erf -> EUP)
    return 0.5 * x * (1.0 + jax.lax.erf(x * _INV_SQRT2))


def _round_up(x, m):
    return ((x + m - 1) // m) * m


def _pick_tile(dim, preferred, align):
    """Largest multiple-of-`align` divisor of `dim` that is <= `preferred`.
    `dim` is assumed to already be a multiple of `align` (wrapper pads)."""
    best = align
    t = align
    limit = min(dim, preferred)
    while t <= limit:
        if dim % t == 0:
            best = t
        t += align
    return best


def _pick_row_tile(m, preferred):
    """Row (sublane) tile: multiple-of-8 divisor of m, <= preferred, preferring
    >= 2 blocks so both v7x TensorCores get work on the 'parallel' axis."""
    t = _pick_tile(m, preferred, 8)
    if t == m and m >= 16:
        start = (m // 2) - ((m // 2) % 8)
        for cand in range(start, 7, -8):
            if cand > 0 and m % cand == 0:
                return cand
    return t


# ----------------------------------------------------------------------------
# Fused MLP kernel:  o = (gelu(x @ W1 + b1)) @ W2 + b2    (weights VMEM-resident)
# ----------------------------------------------------------------------------
def _fused_mlp_kernel(x_ref, w1_ref, b1_ref, w2_ref, b2_ref, o_ref, *, mxu_dtype):
    x = x_ref[...].astype(mxu_dtype)
    h = jnp.dot(x, w1_ref[...].astype(mxu_dtype),
                preferred_element_type=jnp.float32)
    h = _gelu_exact(h + b1_ref[...].astype(jnp.float32))
    y = jnp.dot(h.astype(mxu_dtype), w2_ref[...].astype(mxu_dtype),
                preferred_element_type=jnp.float32)
    y = y + b2_ref[...].astype(jnp.float32)
    o_ref[...] = y.astype(o_ref.dtype)


def _mlp_fused_2d(x2d, w1, b1, w2, b2, *, tm_pref=512, mxu_dtype=jnp.bfloat16):
    """Single-kernel MLP on row-major 2-D input; hidden never hits HBM."""
    M, K = x2d.shape
    H = w1.shape[1]
    N = w2.shape[1]

    M_pad = _round_up(M, 8)       # sublane alignment for the row tiles
    H_pad = _round_up(H, 128)     # lane-dense fc1 / sublane-dense W2
    N_pad = _round_up(N, 128)     # lane-dense (unmasked) output stores

    if M_pad != M:
        x2d = jnp.pad(x2d, ((0, M_pad - M), (0, 0)))
    if H_pad != H:
        w1 = jnp.pad(w1, ((0, 0), (0, H_pad - H)))
        b1 = jnp.pad(b1, ((0, H_pad - H),))
        w2 = jnp.pad(w2, ((0, H_pad - H), (0, 0)))
    if N_pad != N:
        w2 = jnp.pad(w2, ((0, 0), (0, N_pad - N)))
        b2 = jnp.pad(b2, ((0, N_pad - N),))

    tm = _pick_row_tile(M_pad, tm_pref)
    grid = (M_pad // tm,)

    itemsize = jnp.dtype(x2d.dtype).itemsize
    cost = pl.CostEstimate(
        flops=2 * M_pad * H_pad * (K + N_pad),
        transcendentals=M_pad * H_pad,
        bytes_accessed=(M_pad * K + K * H_pad + H_pad * N_pad
                        + H_pad + N_pad + M_pad * N_pad) * itemsize,
    )

    kern = functools.partial(_fused_mlp_kernel, mxu_dtype=mxu_dtype)
    out = pl.pallas_call(
        kern,
        out_shape=jax.ShapeDtypeStruct((M_pad, N_pad), x2d.dtype),
        grid_spec=pltpu.PrefetchScalarGridSpec(
            num_scalar_prefetch=0,
            grid=grid,
            in_specs=[
                pl.BlockSpec((tm, K), lambda i: (i, 0)),         # x rows
                pl.BlockSpec((K, H_pad), lambda i: (0, 0)),      # W1 (whole)
                pl.BlockSpec((1, H_pad), lambda i: (0, 0)),      # b1
                pl.BlockSpec((H_pad, N_pad), lambda i: (0, 0)),  # W2 (whole)
                pl.BlockSpec((1, N_pad), lambda i: (0, 0)),      # b2
            ],
            out_specs=pl.BlockSpec((tm, N_pad), lambda i: (i, 0)),
        ),
        compiler_params=pltpu.CompilerParams(
            dimension_semantics=("parallel",),
        ),
        cost_estimate=cost,
    )(x2d, w1, b1.reshape(1, -1), w2, b2.reshape(1, -1))

    return out[:M, :N]


# ----------------------------------------------------------------------------
# Fallback: generic tiled linear (+ optional fused GELU) for large weights
# ----------------------------------------------------------------------------
def _linear_kernel(x_ref, w_ref, b_ref, o_ref, acc_ref, *, apply_gelu, mxu_dtype):
    k = pl.program_id(2)

    @pl.when(k == 0)
    def _init():
        acc_ref[...] = jnp.zeros_like(acc_ref)

    acc_ref[...] += jnp.dot(
        x_ref[...].astype(mxu_dtype), w_ref[...].astype(mxu_dtype),
        preferred_element_type=jnp.float32,
    )

    @pl.when(k == pl.num_programs(2) - 1)
    def _finalize():
        out = acc_ref[...] + b_ref[...].astype(jnp.float32)
        if apply_gelu:
            out = _gelu_exact(out)
        o_ref[...] = out.astype(o_ref.dtype)


def _pallas_linear_2d(x2d, w, b, *, apply_gelu, out_dtype,
                      tm_pref=512, tn_pref=512, tk_pref=512,
                      mxu_dtype=jnp.bfloat16):
    """Tiled, pipelined  act(x2d @ w + b).
    Caller guarantees: M % 8 == 0, N % 128 == 0, K % 128 == 0 or K < 128."""
    M, K = x2d.shape
    _, N = w.shape

    tm = _pick_row_tile(M, tm_pref)
    tn = _pick_tile(N, tn_pref, 128)
    tk = K if K < 128 else _pick_tile(K, tk_pref, 128)
    grid = (M // tm, N // tn, K // tk)

    itemsize = jnp.dtype(x2d.dtype).itemsize
    cost = pl.CostEstimate(
        flops=2 * M * N * K,
        transcendentals=M * N if apply_gelu else 0,
        bytes_accessed=(M * K * (N // tn) + K * N * (M // tm) + N) * itemsize
        + M * N * jnp.dtype(out_dtype).itemsize,
    )

    kern = functools.partial(_linear_kernel, apply_gelu=apply_gelu,
                             mxu_dtype=mxu_dtype)
    return pl.pallas_call(
        kern,
        out_shape=jax.ShapeDtypeStruct((M, N), out_dtype),
        grid_spec=pltpu.PrefetchScalarGridSpec(
            num_scalar_prefetch=0,
            grid=grid,
            in_specs=[
                pl.BlockSpec((tm, tk), lambda i, j, k: (i, k)),   # x tile
                pl.BlockSpec((tk, tn), lambda i, j, k: (k, j)),   # W tile
                pl.BlockSpec((1, tn), lambda i, j, k: (0, j)),    # bias tile
            ],
            out_specs=pl.BlockSpec((tm, tn), lambda i, j, k: (i, j)),
            scratch_shapes=[pltpu.VMEM((tm, tn), jnp.float32)],   # f32 accumulator
        ),
        compiler_params=pltpu.CompilerParams(
            dimension_semantics=("parallel", "parallel", "arbitrary"),
        ),
        cost_estimate=cost,
    )(x2d, w, b.reshape(1, N))


# ----------------------------------------------------------------------------
# MLP forward:  fc1 -> GELU -> (dropout p=0 == identity) -> fc2 -> identity
# ----------------------------------------------------------------------------
# Fused-path budget: both f32 weight matrices must fit comfortably in VMEM on
# every generation (incl. v7x's 64 MiB), leaving room for x/out tiles + scratch.
_FUSED_WEIGHT_BUDGET_BYTES = 8 * 1024 * 1024


def mlp_forward(x, params, *, mxu_dtype=jnp.bfloat16):
    """x: [..., in_features] -> [..., out_features]. Weights stored as W.T of
    torch, i.e. w1: [in, hidden], w2: [hidden, out]."""
    in_features = x.shape[-1]
    lead = x.shape[:-1]
    x2d = x.reshape(-1, in_features)

    w1, b1 = params["w1"], params["b1"]
    w2, b2 = params["w2"], params["b2"]
    out_features = w2.shape[1]

    w_bytes = (w1.size + w2.size) * jnp.dtype(w1.dtype).itemsize
    if w_bytes <= _FUSED_WEIGHT_BUDGET_BYTES:
        # Single fused kernel: hidden activation never leaves VMEM.
        y = _mlp_fused_2d(x2d, w1, b1, w2, b2, mxu_dtype=mxu_dtype)
    else:
        # Large-weight fallback: two tiled linear calls; hidden makes exactly
        # one HBM round trip, in bf16.
        M, K1 = x2d.shape
        H, N = w1.shape[1], out_features
        M_pad = _round_up(M, 8)
        H_pad = _round_up(H, 128)
        N_pad = _round_up(N, 128)
        K1_pad = K1 if K1 < 128 else _round_up(K1, 128)

        xp = jnp.pad(x2d, ((0, M_pad - M), (0, K1_pad - K1)))
        w1p = jnp.pad(w1, ((0, K1_pad - K1), (0, H_pad - H)))
        b1p = jnp.pad(b1, ((0, H_pad - H),))
        w2p = jnp.pad(w2, ((0, H_pad - H), (0, N_pad - N)))
        b2p = jnp.pad(b2, ((0, N_pad - N),))

        h = _pallas_linear_2d(xp, w1p, b1p, apply_gelu=True,
                              out_dtype=jnp.bfloat16, mxu_dtype=mxu_dtype)
        y = _pallas_linear_2d(h, w2p, b2p, apply_gelu=False,
                              out_dtype=x.dtype, mxu_dtype=mxu_dtype)
        y = y[:M, :N]

    return y.reshape(*lead, out_features)


# ----------------------------------------------------------------------------
# Pure-JAX reference (mirrors the PyTorch forward; exact erf GELU)
# ----------------------------------------------------------------------------
def ref_forward(x, params, *, mxu_dtype=jnp.float32):
    w1, b1, w2, b2 = params["w1"], params["b1"], params["w2"], params["b2"]
    h = jnp.dot(x.astype(mxu_dtype), w1.astype(mxu_dtype),
                preferred_element_type=jnp.float32) + b1
    h = _gelu_exact(h)
    y = jnp.dot(h.astype(mxu_dtype), w2.astype(mxu_dtype),
                preferred_element_type=jnp.float32) + b2
    return y


if __name__ == "__main__":
    # Small shapes consistent with the module: tokens of dim 32, hidden 128.
    B, S, C_IN, C_HID, C_OUT = 2, 8, 32, 128, 32

    key = jax.random.PRNGKey(0)
    k1, k2, k3, k4, k5 = jax.random.split(key, 5)
    x = jax.random.normal(k1, (B, S, C_IN), jnp.float32)
    params = {
        "w1": 0.05 * jax.random.normal(k2, (C_IN, C_HID), jnp.float32),
        "b1": 0.05 * jax.random.normal(k3, (C_HID,), jnp.float32),
        "w2": 0.05 * jax.random.normal(k4, (C_HID, C_OUT), jnp.float32),
        "b2": 0.05 * jax.random.normal(k5, (C_OUT,), jnp.float32),
    }

    out = mlp_forward(x, params)
    jax.block_until_ready(out)
    assert out.shape == (B, S, C_OUT)

    # Reference mirroring the kernel's bf16-MXU / f32-accumulate math.
    ref_bf16 = ref_forward(x, params, mxu_dtype=jnp.bfloat16)
    assert jnp.allclose(out, ref_bf16, atol=1e-3, rtol=1e-3), "mismatch vs bf16 ref"

    # Pure-f32 PyTorch-equivalent forward (difference = bf16 MXU input rounding).
    ref_f32 = ref_forward(x, params, mxu_dtype=jnp.float32)
    assert jnp.allclose(out, ref_f32, atol=2e-2, rtol=2e-2), "mismatch vs f32 ref"

    print("KERNEL_OK")
</pallas_src>

<mosaic_0001>
module attributes {stable_mosaic.version = 11 : i64} {
  func.func @_fused_mlp_kernel(%arg0: i32, %arg1: memref<8x32xf32, #tpu.memory_space<vmem>>, %arg2: memref<32x128xf32, #tpu.memory_space<vmem>>, %arg3: memref<1x128xf32, #tpu.memory_space<vmem>>, %arg4: memref<128x128xf32, #tpu.memory_space<vmem>>, %arg5: memref<1x128xf32, #tpu.memory_space<vmem>>, %arg6: memref<8x128xf32, #tpu.memory_space<vmem>>) attributes {dimension_semantics = [#tpu.dimension_semantics<parallel>], iteration_bounds = array<i64: 2>, scalar_prefetch = 0 : i64, scratch_operands = 0 : i64, tpu.core_type = #tpu.core_type<tc>, window_params = [{transform_indices = @transform_0, window_bounds = array<i64: 8, 32>}, {pipeline_mode = #tpu.pipeline_mode<synchronous>, transform_indices = @transform_1, window_bounds = array<i64: 32, 128>}, {pipeline_mode = #tpu.pipeline_mode<synchronous>, transform_indices = @transform_2, window_bounds = array<i64: 1, 128>}, {pipeline_mode = #tpu.pipeline_mode<synchronous>, transform_indices = @transform_3, window_bounds = array<i64: 128, 128>}, {pipeline_mode = #tpu.pipeline_mode<synchronous>, transform_indices = @transform_4, window_bounds = array<i64: 1, 128>}, {transform_indices = @transform_5, window_bounds = array<i64: 8, 128>}]} {
    %c0 = arith.constant 0 : index
    %c0_0 = arith.constant 0 : index
    %0 = vector.load %arg1[%c0, %c0_0] : memref<8x32xf32, #tpu.memory_space<vmem>>, vector<8x32xf32>
    %1 = arith.truncf %0 : vector<8x32xf32> to vector<8x32xbf16>
    %c0_1 = arith.constant 0 : index
    %c0_2 = arith.constant 0 : index
    %2 = vector.load %arg2[%c0_1, %c0_2] : memref<32x128xf32, #tpu.memory_space<vmem>>, vector<32x128xf32>
    %3 = arith.truncf %2 : vector<32x128xf32> to vector<32x128xbf16>
    %cst = arith.constant dense<0.000000e+00> : vector<8x128xf32>
    %4 = tpu.matmul %1, %3, %cst {dimension_numbers = #tpu.dot_dimension_numbers<[1], [0], [0], [1], [0, 0, 1, 1], [], []>} : vector<8x32xbf16>, vector<32x128xbf16>, vector<8x128xf32> -> vector<8x128xf32>
    %c0_3 = arith.constant 0 : index
    %c0_4 = arith.constant 0 : index
    %5 = vector.load %arg3[%c0_3, %c0_4] : memref<1x128xf32, #tpu.memory_space<vmem>>, vector<1x128xf32>
    %6 = vector.broadcast %5 : vector<1x128xf32> to vector<8x128xf32>
    %7 = arith.addf %4, %6 : vector<8x128xf32>
    %cst_5 = arith.constant 5.000000e-01 : f32
    %8 = vector.broadcast %cst_5 : f32 to vector<8x128xf32>
    %9 = arith.mulf %8, %7 : vector<8x128xf32>
    %cst_6 = arith.constant 0.707106769 : f32
    %10 = vector.broadcast %cst_6 : f32 to vector<8x128xf32>
    %11 = arith.mulf %7, %10 : vector<8x128xf32>
    %12 = math.erf %11 : vector<8x128xf32>
    %cst_7 = arith.constant 1.000000e+00 : f32
    %13 = vector.broadcast %cst_7 : f32 to vector<8x128xf32>
    %14 = arith.addf %13, %12 : vector<8x128xf32>
    %15 = arith.mulf %9, %14 : vector<8x128xf32>
    %16 = arith.truncf %15 : vector<8x128xf32> to vector<8x128xbf16>
    %c0_8 = arith.constant 0 : index
    %c0_9 = arith.constant 0 : index
    %17 = vector.load %arg4[%c0_8, %c0_9] : memref<128x128xf32, #tpu.memory_space<vmem>>, vector<128x128xf32>
    %18 = arith.truncf %17 : vector<128x128xf32> to vector<128x128xbf16>
    %cst_10 = arith.constant dense<0.000000e+00> : vector<8x128xf32>
    %19 = tpu.matmul %16, %18, %cst_10 {dimension_numbers = #tpu.dot_dimension_numbers<[1], [0], [0], [1], [0, 0, 1, 1], [], []>} : vector<8x128xbf16>, vector<128x128xbf16>, vector<8x128xf32> -> vector<8x128xf32>
    %c0_11 = arith.constant 0 : index
    %c0_12 = arith.constant 0 : index
    %20 = vector.load %arg5[%c0_11, %c0_12] : memref<1x128xf32, #tpu.memory_space<vmem>>, vector<1x128xf32>
    %21 = vector.broadcast %20 : vector<1x128xf32> to vector<8x128xf32>
    %22 = arith.addf %19, %21 : vector<8x128xf32>
    %c0_13 = arith.constant 0 : index
    %c0_14 = arith.constant 0 : index
    %23 = vector.load %arg6[%c0_13, %c0_14] : memref<8x128xf32, #tpu.memory_space<vmem>>, vector<8x128xf32>
    tpu.vector_store %arg6[%c0_13, %c0_14], %22 {strides = array<i32>} : memref<8x128xf32, #tpu.memory_space<vmem>>, vector<8x128xf32>,
    return
  }
  func.func @transform_0(%arg0: i32) -> (i32, i32) {
    %c0_i32 = arith.constant 0 : i32
    %c0_i32_0 = arith.constant 0 : i32
    return %arg0, %c0_i32 : i32, i32
  }
  func.func @transform_1(%arg0: i32) -> (i32, i32) {
    %c0_i32 = arith.constant 0 : i32
    %c0_i32_0 = arith.constant 0 : i32
    %c0_i32_1 = arith.constant 0 : i32
    return %c0_i32, %c0_i32_0 : i32, i32
  }
  func.func @transform_2(%arg0: i32) -> (i32, i32) {
    %c0_i32 = arith.constant 0 : i32
    %c0_i32_0 = arith.constant 0 : i32
    %c0_i32_1 = arith.constant 0 : i32
    return %c0_i32, %c0_i32_0 : i32, i32
  }
  func.func @transform_3(%arg0: i32) -> (i32, i32) {
    %c0_i32 = arith.constant 0 : i32
    %c0_i32_0 = arith.constant 0 : i32
    %c0_i32_1 = arith.constant 0 : i32
    return %c0_i32, %c0_i32_0 : i32, i32
  }
  func.func @transform_4(%arg0: i32) -> (i32, i32) {
    %c0_i32 = arith.constant 0 : i32
    %c0_i32_0 = arith.constant 0 : i32
    %c0_i32_1 = arith.constant 0 : i32
    return %c0_i32, %c0_i32_0 : i32, i32
  }
  func.func @transform_5(%arg0: i32) -> (i32, i32) {
    %c0_i32 = arith.constant 0 : i32
    %c0_i32_0 = arith.constant 0 : i32
    return %arg0, %c0_i32 : i32, i32
  }
}

</mosaic_0001>

<llo_original>
// kernel: tpu_custom_call.1
$region0: #{tpu_custom_call.1}
  #allocation0 [shape = 'u32[]', space=smem, size = 0x4, offset = 0x4, fixed_abs, tag = 'smem constant byte address 0x4 - core index']
  #allocation1 [shape = 'u32[144,128]{1,0:T(1,128)}', space=vmem, size = 0x12000, scoped, tag = 'internal scratch']
  %s0 = inlined_call_operand.hbm [shape: f32[16,32], index: 0, kind: input, shape index: {}]
  %s1 = inlined_call_operand.hbm [shape: f32[32,128], index: 1, kind: input, shape index: {}]
  %s2 = inlined_call_operand.vmem [shape: f32[1,128], index: 2, kind: input, shape index: {}]
  %s3 = inlined_call_operand.hbm [shape: f32[128,128], index: 3, kind: input, shape index: {}]
  %s4 = inlined_call_operand.vmem [shape: f32[1,128], index: 4, kind: input, shape index: {}]
  %s5 = inlined_call_operand.hbm [shape: f32[16,128], index: 5, kind: output, shape index: {}]
  %s6 = sld [smem:[#allocation0]]
  $region65: #{tpu_custom_call.1} parent=0
    _
  %s8 = ssub.s32 1, %s6
  %s9 = scalar_select 0, %s8, %s6
  $region1: #{tpu_custom_call.1} parent=0
    #allocation2 [shape = 'u8[8192]{0}', space=vmem, size = 0x2000, scoped, tag = 'input window, operand 0']
    #allocation3 [shape = 's32[2]{0}', space=sflag, size = 0x8, scoped, tag = 'scoped memory for tpu_custom_call.1']
    #allocation4 [shape = 's32[2]{0}', space=sflag, size = 0x8, scoped, tag = 'scoped memory for tpu_custom_call.1']
    #allocation5 [shape = 'u8[16384]{0}', space=vmem, size = 0x4000, scoped, tag = 'input window, operand 1, single buffered']
    #allocation6 [shape = 's32[1]{0}', space=sflag, size = 0x4, scoped, tag = 'scoped memory for tpu_custom_call.1']
    #allocation7 [shape = 'u8[65536]{0}', space=vmem, size = 0x10000, scoped, tag = 'input window, operand 3, single buffered']
    #allocation8 [shape = 'u8[8192]{0}', space=vmem, size = 0x2000, scoped, tag = 'output window, operand 0']
    %10 = vsyncpa [#allocation3], 0
    %s11 = scalar_lea.sflag [#allocation3], 1
    %12 = vsyncpa %s11, 0
    %13 = vsyncpa [#allocation6], 0
    %14 = vsyncpa [#allocation4], 0
    %s15 = scalar_lea.sflag [#allocation4], 1
    %16 = vsyncpa %s15, 0
    loop: start=0, step=1, limit=4
    $region2: #{tpu_custom_call.1} parent=1 // loop_pre_header
      _
    $region3: #{tpu_custom_call.1} parent=1 // loop_header
      %s18 = sphi 0, %s22
      %p19 = scmp.ge.s32.totalorder %s18, 4
      %s28 = sphi 0, %s30
      %s31 = sphi 0, %s28
      %s32 = sphi 0, %s31
      %s48 = sphi 0, %s32
      %s52 = sphi 0, %s52
      %s54 = sphi 0, %s52
      %s55 = sphi 0, %s54
      %s69 = sphi 0, %s55
      %s73 = sphi 0, %s73
      %s75 = sphi 0, %s73
      %s76 = sphi 0, %s75
      %s90 = sphi 0, %s76
      %s94 = sphi 0, %s94
      %s96 = sphi 0, %s94
      %s97 = sphi 0, %s96
      %s111 = sphi 0, %s97
      %s115 = sphi 0, %s115
      %s117 = sphi 0, %s115
      %s118 = sphi 0, %s117
      %s132 = sphi 0, %s118
      %s138 = sphi 0, %s140
      %s141 = sphi 0, %s138
      %s142 = sphi 0, %s141
      %s158 = sphi 0, %s142
    $region4: #{tpu_custom_call.1} parent=1 // loop_header_branch
      %21 = sbr.rel (%p19) target = $region8
    $region5: #{tpu_custom_call.1} parent=1 // loop_body
      %s23 = ssub.s32 %s18, 1
      %s24 = ssub.s32 %s18, 2
      %s25 = sadd.s32 %s18, 1
      %s26 = ssub.s32 %s18, %s25
      %p27 = scmp.eq.s32.totalorder %s26, 0
      %s29 = sadd.s32 %s28, 1
      %s30 = scalar_select %p27, %s28, %s29
      %p33 = pneg %p27
      %p34 = scmp.eq.s32.totalorder %s18, 1
      %p35 = por %p33, %p34
      %p36 = scmp.ne.s32.totalorder %s28, %s31
      %p37 = scmp.eq.s32.totalorder %s18, 0
      %p38 = por %p36, %p37
      %p39 = scmp.ne.s32.totalorder %s28, %s31
      %p40 = scmp.eq.s32.totalorder %s23, 1
      %p41 = por %p39, %p40
      %p42 = scmp.ne.s32.totalorder %s31, %s32
      %p43 = scmp.eq.s32.totalorder %s23, 0
      %p44 = por %p42, %p43
      %p45 = scmp.ne.s32.totalorder %s31, %s32
      %p46 = scmp.eq.s32.totalorder %s24, 1
      %p47 = por %p45, %p46
      %p49 = scmp.ne.s32.totalorder %s32, %s48
      %p50 = scmp.eq.s32.totalorder %s24, 0
      %p51 = por %p49, %p50
      %s53 = sadd.s32 %s52, 1
      %p56 = scmp.eq.s32.totalorder %s18, 1
      %p57 = scmp.ne.s32.totalorder %s52, %s54
      %p58 = scmp.eq.s32.totalorder %s18, 0
      %p59 = por %p57, %p58
      %p60 = scmp.ne.s32.totalorder %s52, %s54
      %p61 = scmp.eq.s32.totalorder %s23, 1
      %p62 = por %p60, %p61
      %p63 = scmp.ne.s32.totalorder %s54, %s55
      %p64 = scmp.eq.s32.totalorder %s23, 0
      %p65 = por %p63, %p64
      %p66 = scmp.ne.s32.totalorder %s54, %s55
      %p67 = scmp.eq.s32.totalorder %s24, 1
      %p68 = por %p66, %p67
      %p70 = scmp.ne.s32.totalorder %s55, %s69
      %p71 = scmp.eq.s32.totalorder %s24, 0
      %p72 = por %p70, %p71
      %s74 = sadd.s32 %s73, 1
      %p77 = scmp.eq.s32.totalorder %s18, 1
      %p78 = scmp.ne.s32.totalorder %s73, %s75
      %p79 = scmp.eq.s32.totalorder %s18, 0
      %p80 = por %p78, %p79
      %p81 = scmp.ne.s32.totalorder %s73, %s75
      %p82 = scmp.eq.s32.totalorder %s23, 1
      %p83 = por %p81, %p82
      %p84 = scmp.ne.s32.totalorder %s75, %s76
      %p85 = scmp.eq.s32.totalorder %s23, 0
      %p86 = por %p84, %p85
      %p87 = scmp.ne.s32.totalorder %s75, %s76
      %p88 = scmp.eq.s32.totalorder %s24, 1
      %p89 = por %p87, %p88
      %p91 = scmp.ne.s32.totalorder %s76, %s90
      %p92 = scmp.eq.s32.totalorder %s24, 0
      %p93 = por %p91, %p92
      %s95 = sadd.s32 %s94, 1
      %p98 = scmp.eq.s32.totalorder %s18, 1
      %p99 = scmp.ne.s32.totalorder %s94, %s96
      %p100 = scmp.eq.s32.totalorder %s18, 0
      %p101 = por %p99, %p100
      %p102 = scmp.ne.s32.totalorder %s94, %s96
      %p103 = scmp.eq.s32.totalorder %s23, 1
      %p104 = por %p102, %p103
      %p105 = scmp.ne.s32.totalorder %s96, %s97
      %p106 = scmp.eq.s32.totalorder %s23, 0
      %p107 = por %p105, %p106
      %p108 = scmp.ne.s32.totalorder %s96, %s97
      %p109 = scmp.eq.s32.totalorder %s24, 1
      %p110 = por %p108, %p109
      %p112 = scmp.ne.s32.totalorder %s97, %s111
      %p113 = scmp.eq.s32.totalorder %s24, 0
      %p114 = por %p112, %p113
      %s116 = sadd.s32 %s115, 1
      %p119 = scmp.eq.s32.totalorder %s18, 1
      %p120 = scmp.ne.s32.totalorder %s115, %s117
      %p121 = scmp.eq.s32.totalorder %s18, 0
      %p122 = por %p120, %p121
      %p123 = scmp.ne.s32.totalorder %s115, %s117
      %p124 = scmp.eq.s32.totalorder %s23, 1
      %p125 = por %p123, %p124
      %p126 = scmp.ne.s32.totalorder %s117, %s118
      %p127 = scmp.eq.s32.totalorder %s23, 0
      %p128 = por %p126, %p127
      %p129 = scmp.ne.s32.totalorder %s117, %s118
      %p130 = scmp.eq.s32.totalorder %s24, 1
      %p131 = por %p129, %p130
      %p133 = scmp.ne.s32.totalorder %s118, %s132
      %p134 = scmp.eq.s32.totalorder %s24, 0
      %p135 = por %p133, %p134
      %s136 = ssub.s32 %s18, %s25
      %p137 = scmp.eq.s32.totalorder %s136, 0
      %s139 = sadd.s32 %s138, 1
      %s140 = scalar_select %p137, %s138, %s139
      %p143 = pneg %p137
      %p144 = scmp.eq.s32.totalorder %s18, 1
      %p145 = por %p143, %p144
      %p146 = scmp.ne.s32.totalorder %s138, %s141
      %p147 = scmp.eq.s32.totalorder %s18, 0
      %p148 = por %p146, %p147
      %p149 = scmp.ne.s32.totalorder %s138, %s141
      %p150 = scmp.eq.s32.totalorder %s23, 1
      %p151 = por %p149, %p150
      %p152 = scmp.ne.s32.totalorder %s141, %s142
      %p153 = scmp.eq.s32.totalorder %s23, 0
      %p154 = por %p152, %p153
      %p155 = scmp.ne.s32.totalorder %s141, %s142
      %p156 = scmp.eq.s32.totalorder %s24, 1
      %p157 = por %p155, %p156
      %p159 = scmp.ne.s32.totalorder %s142, %s158
      %p160 = scmp.eq.s32.totalorder %s24, 0
      %p161 = por %p159, %p160
      %p162 = scmp.le.s32.totalorder 1, %s18
      %p163 = scmp.lt.s32.totalorder %s18, 3
      %p164 = pnand %p162, %p163
      %p165 = pneg %p164
      // Predicated region
      $region9: #{tpu_custom_call.1} parent=5 // pred_check
        _
      $region10: #{tpu_custom_call.1} parent=5 // pred_check_branch
        %167 = sbr.rel (%p164) target = $region12
      $region11: #{tpu_custom_call.1} parent=5 // pred_region
        %s168 = ssub.s32 %s18, 1
        // Predicated region
        $region13: #{tpu_custom_call.1} parent=11 // pred_check
          %p169 = pneg %p65
        $region14: #{tpu_custom_call.1} parent=11 // pred_check_branch
          %171 = sbr.rel (%p169) target = $region16
        $region15: #{tpu_custom_call.1} parent=11 // pred_region
          %s173 = ssub.s32 512, 512
          %174 = vsyncadd [#allocation6], %s173
          %s175 = sshll.u32 [#allocation5], 4
          %s176 = int_to_ptr.vmem [resolvable:$true] %s175
          %181 = dma.hbm_to_vmem [thread:$0]  %s1, 512, %s176, [#allocation6], 128, 128, 8
        $region16: #{tpu_custom_call.1} parent=11 // pred_fallthru
          _
        // Predicated region
        $region17: #{tpu_custom_call.1} parent=11 // pred_check
          %p182 = pneg %p86
        $region18: #{tpu_custom_call.1} parent=11 // pred_check_branch
          %184 = sbr.rel (%p182) target = $region20
        $region19: #{tpu_custom_call.1} parent=11 // pred_region
          _
        $region20: #{tpu_custom_call.1} parent=11 // pred_fallthru
          _
        // Predicated region
        $region21: #{tpu_custom_call.1} parent=11 // pred_check
          %p185 = pneg %p107
        $region22: #{tpu_custom_call.1} parent=11 // pred_check_branch
          %187 = sbr.rel (%p185) target = $region24
        $region23: #{tpu_custom_call.1} parent=11 // pred_region
          %s189 = ssub.s32 2048, 2048
          %190 = vsyncadd [#allocation6], %s189
          %s191 = sshll.u32 [#allocation7], 4
          %s192 = int_to_ptr.vmem [resolvable:$true] %s191
          %197 = dma.hbm_to_vmem [thread:$0]  %s3, 2048, %s192, [#allocation6], 128, 128, 8
        $region24: #{tpu_custom_call.1} parent=11 // pred_fallthru
          _
        // Predicated region
        $region25: #{tpu_custom_call.1} parent=11 // pred_check
          %p198 = pneg %p128
        $region26: #{tpu_custom_call.1} parent=11 // pred_check_branch
          %200 = sbr.rel (%p198) target = $region28
        $region27: #{tpu_custom_call.1} parent=11 // pred_region
          _
        $region28: #{tpu_custom_call.1} parent=11 // pred_fallthru
          _
      $region12: #{tpu_custom_call.1} parent=5 // pred_fallthru
        _
      %p201 = scmp.lt.s32.totalorder %s18, 2
      // Predicated region
      $region29: #{tpu_custom_call.1} parent=5 // pred_check
        %p202 = pneg %p201
      $region30: #{tpu_custom_call.1} parent=5 // pred_check_branch
        %204 = sbr.rel (%p202) target = $region32
      $region31: #{tpu_custom_call.1} parent=5 // pred_region
        // Predicated region
        $region33: #{tpu_custom_call.1} parent=31 // pred_check
          %p205 = pneg %p38
        $region34: #{tpu_custom_call.1} parent=31 // pred_check_branch
          %207 = sbr.rel (%p205) target = $region36
        $region35: #{tpu_custom_call.1} parent=31 // pred_region
          %s208 = sand.u32 %s28, 1
          %s209 = scalar_lea.sflag [#allocation3], %s208
          %s210 = sand.u32 %s28, 1
          %s211 = smul.addr %s210, 8
          %s212 = scalar_lea.vmem [#allocation2], %s211
          %s214 = ssub.s32 128, 128
          %215 = vsyncadd %s209, %s214
          %s216 = smul.addr %s18, 128
          %s217 = scalar_lea.hbm %s0, %s216
          %s219 = sshll.u32 %s212, 4
          %s220 = int_to_ptr.vmem [resolvable:$true] %s219
          %222 = dma.hbm_to_vmem [thread:$0]  %s217, 128, %s220, %s209
        $region36: #{tpu_custom_call.1} parent=31 // pred_fallthru
          _
      $region32: #{tpu_custom_call.1} parent=5 // pred_fallthru
        _
      %p223 = scmp.le.s32.totalorder 1, %s18
      %p224 = scmp.lt.s32.totalorder %s18, 3
      %p225 = pnand %p223, %p224
      %p226 = pneg %p225
      // Predicated region
      $region37: #{tpu_custom_call.1} parent=5 // pred_check
        _
      $region38: #{tpu_custom_call.1} parent=5 // pred_check_branch
        %228 = sbr.rel (%p225) target = $region40
      $region39: #{tpu_custom_call.1} parent=5 // pred_region
        %s229 = ssub.s32 %s18, 1
        %s230 = sand.u32 %s31, 1
        %s231 = scalar_lea.sflag [#allocation3], %s230
        %s232 = sand.u32 %s31, 1
        %s233 = smul.addr %s232, 8
        %s234 = scalar_lea.vmem [#allocation2], %s233
        // Predicated region
        $region41: #{tpu_custom_call.1} parent=39 // pred_check
          %p235 = pneg %p44
        $region42: #{tpu_custom_call.1} parent=39 // pred_check_branch
          %237 = sbr.rel (%p235) target = $region44
        $region43: #{tpu_custom_call.1} parent=39 // pred_region
          %238 = dma.done %s231, 128
        $region44: #{tpu_custom_call.1} parent=39 // pred_fallthru
          _
        // Predicated region
        $region45: #{tpu_custom_call.1} parent=39 // pred_check
          %p239 = pneg %p65
        $region46: #{tpu_custom_call.1} parent=39 // pred_check_branch
          %241 = sbr.rel (%p239) target = $region48
        $region47: #{tpu_custom_call.1} parent=39 // pred_region
          %242 = dma.done [#allocation6], 512
        $region48: #{tpu_custom_call.1} parent=39 // pred_fallthru
          _
        // Predicated region
        $region49: #{tpu_custom_call.1} parent=39 // pred_check
          %p243 = pneg %p107
        $region50: #{tpu_custom_call.1} parent=39 // pred_check_branch
          %245 = sbr.rel (%p243) target = $region52
        $region51: #{tpu_custom_call.1} parent=39 // pred_region
          %246 = dma.done [#allocation6], 2048
        $region52: #{tpu_custom_call.1} parent=39 // pred_fallthru
          _
        %s247 = sand.u32 %s31, 1
        %s248 = scalar_lea.sflag [#allocation3], %s247
        %s249 = sand.u32 %s31, 1
        %s250 = smul.addr %s249, 8
        %s251 = scalar_lea.vmem [#allocation2], %s250
        %p252 = pneg %p44
        %p253 = pneg %p41
        %p254 = pneg %p65
        %p255 = pneg %p62
        %p256 = pneg %p86
        %p257 = pneg %p83
        %p258 = pneg %p107
        %p259 = pneg %p104
        %p260 = pneg %p128
        %p261 = pneg %p125
        %p262 = pneg %p154
        %p263 = pneg %p151
        %s264 = sand.u32 %s141, 1
        %s265 = scalar_lea.sflag [#allocation4], %s264
        %s266 = sand.u32 %s141, 1
        %s267 = smul.addr %s266, 8
        %s268 = scalar_lea.vmem [#allocation8], %s267
        %v270 = vld [vmem:[%s234] sm:$0xff]
        %v271 = vpack.c.bf16 %v270, %v270
        %v272 = vld [vmem:[#allocation5] sm:$0xff]
        %v273 = vld [vmem:[#allocation5 + $0x8] sm:$0xff]
        %v274 = vld [vmem:[#allocation5 + $0x10] sm:$0xff]
        %v275 = vld [vmem:[#allocation5 + $0x18] sm:$0xff]
        %v276 = vpack.c.bf16 %v273, %v272
        %v277 = vpack.c.bf16 %v275, %v274
        %v278 = vld [vmem:[%s2] sm:$0x1]
        %v280 = vlaneseq
        %v281 = vshrl.u32 %v280, 7
        %v282 = vsub.s32 0, %v281
        %v283 = vrot.slane %v278, %v282
        %vm285 = vcmask 261120
        %v287 = vsel %vm285, %v271, 0
        %289 = vmatprep.subr.bf16.mxu0 0
        %290 = vmatpush1.bf16.msra.mxu0 %v276
        %291 = vmatprep.subr.bf16.mxu0 0
        %292 = vmatpush1.bf16.msra.mxu0 %v277
        %293 = vmatprep.subr.bf16.mxu0 0
        %294 = vmatpush1.bf16.msra.mxu0 0
        %295 = vmatprep.subr.bf16.mxu0 0
        %296 = vmatpush1.bf16.msra.mxu0 0
        %297 = vmatprep.subr.bf16.mxu0 0
        %298 = vmatpush1.bf16.msra.mxu0 0
        %299 = vmatprep.subr.bf16.mxu0 0
        %300 = vmatpush1.bf16.msra.mxu0 0
        %301 = vmatprep.subr.bf16.mxu0 0
        %302 = vmatpush1.bf16.msra.mxu0 0
        %303 = vmatprep.subr.bf16.mxu0 0
        %304 = vmatpush1.bf16.msra.mxu0 0
        %305 = vmatprep.subr.bf16.mxu0 0
        %306 = vmatpush1.bf16.msra.mxu0 0
        %307 = vmatprep.subr.bf16.mxu0 0
        %308 = vmatpush1.bf16.msra.mxu0 0
        %309 = vmatprep.subr.bf16.mxu0 0
        %310 = vmatpush1.bf16.msra.mxu0 0
        %311 = vmatprep.subr.bf16.mxu0 0
        %312 = vmatpush1.bf16.msra.mxu0 0
        %313 = vmatprep.subr.bf16.mxu0 0
        %314 = vmatpush1.bf16.msra.mxu0 0
        %315 = vmatprep.subr.bf16.mxu0 0
        %316 = vmatpush1.bf16.msra.mxu0 0
        %317 = vmatprep.subr.bf16.mxu0 0
        %318 = vmatpush1.bf16.msra.mxu0 0
        %319 = vmatprep.subr.bf16.mxu0 0
        %320 = vmatpush1.bf16.msra.mxu0 0
        %321 = vmatprep.mubr.bf16.mxu0 0
        %322 = vmatmul.mubr.bf16.gmra.mrb[0].mxu0 %v287
        %v323 = vpop.f32.mrb[0].mxu0
        %v324 = vadd.f32 %v283, %v323
        %v325 = vpop.f32.mrb[0].mxu0
        %v326 = vpop.f32.mrb[0].mxu0
        %v327 = vpop.f32.mrb[0].mxu0
        %328 = vdwg.mxu0
        %v329 = vmul.f32 %v324, 0.5
        %v330 = vmul.f32 %v324, 0.70710677
        %v331 = verf.f32.pop %v330
        %v332 = vadd.f32 %v331, 1.0
        %v333 = vmul.f32 %v329, %v332
        %v334 = vpack.c.bf16 %v333, %v333
        %v335 = vld [vmem:[#allocation7] sm:$0xff]
        %v336 = vld [vmem:[#allocation7 + $0x8] sm:$0xff]
        %v337 = vld [vmem:[#allocation7 + $0x10] sm:$0xff]
        %v338 = vld [vmem:[#allocation7 + $0x18] sm:$0xff]
        %v339 = vld [vmem:[#allocation7 + $0x20] sm:$0xff]
        %v340 = vld [vmem:[#allocation7 + $0x28] sm:$0xff]
        %v341 = vld [vmem:[#allocation7 + $0x30] sm:$0xff]
        %v342 = vld [vmem:[#allocation7 + $0x38] sm:$0xff]
        %v343 = vld [vmem:[#allocation7 + $0x40] sm:$0xff]
        %v344 = vld [vmem:[#allocation7 + $0x48] sm:$0xff]
        %v345 = vld [vmem:[#allocation7 + $0x50] sm:$0xff]
        %v346 = vld [vmem:[#allocation7 + $0x58] sm:$0xff]
        %v347 = vld [vmem:[#allocation7 + $0x60] sm:$0xff]
        %v348 = vld [vmem:[#allocation7 + $0x68] sm:$0xff]
        %v349 = vld [vmem:[#allocation7 + $0x70] sm:$0xff]
        %v350 = vld [vmem:[#allocation7 + $0x78] sm:$0xff]
        %v351 = vpack.c.bf16 %v336, %v335
        %v352 = vpack.c.bf16 %v338, %v337
        %v353 = vpack.c.bf16 %v340, %v339
        %v354 = vpack.c.bf16 %v342, %v341
        %v355 = vpack.c.bf16 %v344, %v343
        %v356 = vpack.c.bf16 %v346, %v345
        %v357 = vpack.c.bf16 %v348, %v347
        %v358 = vpack.c.bf16 %v350, %v349
        %v359 = vld [vmem:[%s4] sm:$0x1]
        %v361 = vlaneseq
        %v362 = vshrl.u32 %v361, 7
        %v363 = vsub.s32 0, %v362
        %v364 = vrot.slane %v359, %v363
        %366 = vmatprep.subr.bf16.mxu0 0
        %367 = vmatpush1.bf16.msra.mxu0 %v351
        %368 = vmatprep.subr.bf16.mxu0 0
        %369 = vmatpush1.bf16.msra.mxu0 %v352
        %370 = vmatprep.subr.bf16.mxu0 0
        %371 = vmatpush1.bf16.msra.mxu0 %v353
        %372 = vmatprep.subr.bf16.mxu0 0
        %373 = vmatpush1.bf16.msra.mxu0 %v354
        %374 = vmatprep.subr.bf16.mxu0 0
        %375 = vmatpush1.bf16.msra.mxu0 %v355
        %376 = vmatprep.subr.bf16.mxu0 0
        %377 = vmatpush1.bf16.msra.mxu0 %v356
        %378 = vmatprep.subr.bf16.mxu0 0
        %379 = vmatpush1.bf16.msra.mxu0 %v357
        %380 = vmatprep.subr.bf16.mxu0 0
        %381 = vmatpush1.bf16.msra.mxu0 %v358
        %382 = vmatprep.subr.bf16.mxu0 0
        %383 = vmatpush1.bf16.msra.mxu0 0
        %384 = vmatprep.subr.bf16.mxu0 0
        %385 = vmatpush1.bf16.msra.mxu0 0
        %386 = vmatprep.subr.bf16.mxu0 0
        %387 = vmatpush1.bf16.msra.mxu0 0
        %388 = vmatprep.subr.bf16.mxu0 0
        %389 = vmatpush1.bf16.msra.mxu0 0
        %390 = vmatprep.subr.bf16.mxu0 0
        %391 = vmatpush1.bf16.msra.mxu0 0
        %392 = vmatprep.subr.bf16.mxu0 0
        %393 = vmatpush1.bf16.msra.mxu0 0
        %394 = vmatprep.subr.bf16.mxu0 0
        %395 = vmatpush1.bf16.msra.mxu0 0
        %396 = vmatprep.subr.bf16.mxu0 0
        %397 = vmatpush1.bf16.msra.mxu0 0
        %398 = vmatprep.mubr.bf16.mxu0 0
        %399 = vmatmul.mubr.bf16.gmra.mrb[0].mxu0 %v334
        %v400 = vpop.f32.mrb[0].mxu0
        %v401 = vadd.f32 %v364, %v400
        %v402 = vpop.f32.mrb[0].mxu0
        %v403 = vpop.f32.mrb[0].mxu0
        %v404 = vpop.f32.mrb[0].mxu0
        %405 = vdwg.mxu0
        %406 = vst [vmem:[%s268] sm:$0xff] %v401
        %s407 = sand.u32 %s141, 1
        %s408 = scalar_lea.sflag [#allocation4], %s407
        %s409 = sand.u32 %s141, 1
        %s410 = smul.addr %s409, 8
        %s411 = scalar_lea.vmem [#allocation8], %s410
        // Predicated region
        $region53: #{tpu_custom_call.1} parent=39 // pred_check
          %p412 = pneg %p151
        $region54: #{tpu_custom_call.1} parent=39 // pred_check_branch
          %414 = sbr.rel (%p412) target = $region56
        $region55: #{tpu_custom_call.1} parent=39 // pred_region
          %s416 = ssub.s32 128, 128
          %417 = vsyncadd %s408, %s416
          %s418 = smul.addr %s23, 128
          %s419 = scalar_lea.hbm %s5, %s418
          %s421 = sshll.u32 %s411, 4
          %s422 = int_to_ptr.vmem [resolvable:$true] %s421
          %424 = dma.vmem_to_hbm [thread:$0]  %s422, 128, %s419, %s408
        $region56: #{tpu_custom_call.1} parent=39 // pred_fallthru
          _
      $region40: #{tpu_custom_call.1} parent=5 // pred_fallthru
        _
      %p425 = scmp.le.s32.totalorder 2, %s18
      // Predicated region
      $region57: #{tpu_custom_call.1} parent=5 // pred_check
        %p426 = pneg %p425
      $region58: #{tpu_custom_call.1} parent=5 // pred_check_branch
        %428 = sbr.rel (%p426) target = $region60
      $region59: #{tpu_custom_call.1} parent=5 // pred_region
        %s429 = ssub.s32 %s18, 2
        // Predicated region
        $region61: #{tpu_custom_call.1} parent=59 // pred_check
          %p430 = pneg %p157
        $region62: #{tpu_custom_call.1} parent=59 // pred_check_branch
          %432 = sbr.rel (%p430) target = $region64
        $region63: #{tpu_custom_call.1} parent=59 // pred_region
          %s433 = sand.u32 %s142, 1
          %s434 = scalar_lea.sflag [#allocation4], %s433
          %s435 = sand.u32 %s142, 1
          %s436 = smul.addr %s435, 8
          %s437 = scalar_lea.vmem [#allocation8], %s436
          %438 = dma.done %s434, 128
        $region64: #{tpu_custom_call.1} parent=59 // pred_fallthru
          _
      $region60: #{tpu_custom_call.1} parent=5 // pred_fallthru
        _
    $region6: #{tpu_custom_call.1} parent=1 // loop_footer
      %s22 = sadd.s32 1, %s18
    $region7: #{tpu_custom_call.1} parent=1 // loop_footer_branch
      %17 = sbr.rel target = $region3
    $region8: #{tpu_custom_call.1} parent=1 // loop_exit
      _
    %439 = vsyncpa [#allocation3], 1
    %s440 = scalar_lea.sflag [#allocation3], 1
    %441 = vsyncpa %s440, 1
    %442 = vsyncpa [#allocation6], 1
    %443 = vsyncpa [#allocation4], 1
    %s444 = scalar_lea.sflag [#allocation4], 1
    %445 = vsyncpa %s444, 1

</llo_original>
